<compile_context>
chip_gen: v7x
topology: tpu7x:2x2x1
jax: 0.10.0
libtpu: 0.0.40
codegen_flags: <defaults>
</compile_context>

<pallas_src>
import jax
import jax.numpy as jnp
from jax.experimental import pallas as pl
from jax.experimental.pallas import tpu as pltpu

EPS = 1e-5


def _linear_test_model_kernel(x_ref, w1b_ref, b1c_ref, w2c_ref, b2r_ref,
                              out_ref, relu_ref, bn1_ref, avg_ref):
    # x_ref   : (N*C_in,  HW)        VMEM  spatial-last view of NCHW input
    # w1b_ref : (N*C_mid, N*C_in)    VMEM  block-diagonal kron(eye(N), W1)
    # b1c_ref : (N*C_mid, 1)         VMEM  conv1 bias column (tiled over N)
    # w2c_ref : (N*C_mid, C_out)     VMEM  tile(W2.T) over N
    # b2r_ref : (1, C_out)           VMEM  conv2 bias row
    # out_ref : (N, C_out)           VMEM  bn2 output (== (N,C_out,1,1) NCHW)
    # relu_ref: (N*C_mid, HW)        VMEM  relu(conv1)
    # bn1_ref : (N*C_mid, HW)        VMEM  bn1 output
    # avg_ref : (N*C_mid, 1)         VMEM  adaptive-avg-pool(1) output
    n_batch, c_out = out_ref.shape
    rows_mid = relu_ref.shape[0]
    c_mid = rows_mid // n_batch
    hw = x_ref.shape[1]
    inv_hw = 1.0 / hw
    inv_nhw = 1.0 / (n_batch * hw)
    inv_n = 1.0 / n_batch

    x = x_ref[...]                                           # (N*C_in, HW)

    # ---- conv1 (1x1) + bias + ReLU: one block-diag matmul, one lane-dense store ----
    relu1 = jnp.maximum(
        jnp.dot(w1b_ref[...], x, preferred_element_type=jnp.float32) + b1c_ref[...],
        0.0)                                                 # (N*C_mid, HW)
    relu_ref[...] = relu1

    # ---- bn1 (training mode, biased): one-pass slab statistics ----
    row_sum = jnp.sum(relu1, axis=-1, keepdims=True)         # (N*C_mid, 1)
    row_sumsq = jnp.sum(relu1 * relu1, axis=-1, keepdims=True)

    # combine the N samples per channel: contiguous (C_mid, 1) column adds
    ch_sum = row_sum[0:c_mid, :]
    ch_sumsq = row_sumsq[0:c_mid, :]
    for n in range(1, n_batch):
        ch_sum = ch_sum + row_sum[n * c_mid:(n + 1) * c_mid, :]
        ch_sumsq = ch_sumsq + row_sumsq[n * c_mid:(n + 1) * c_mid, :]

    mean1 = ch_sum * inv_nhw                                  # (C_mid, 1)
    var1 = ch_sumsq * inv_nhw - mean1 * mean1                 # biased variance
    inv_std1 = jax.lax.rsqrt(var1 + EPS)

    # broadcast once into (N*C_mid, 1) columns, apply to the whole slab
    mean1_col = jnp.concatenate([mean1] * n_batch, axis=0)
    inv_std1_col = jnp.concatenate([inv_std1] * n_batch, axis=0)

    bn1 = (relu1 - mean1_col) * inv_std1_col                  # (N*C_mid, HW)
    bn1_ref[...] = bn1

    # ---- AdaptiveAvgPool2d(1): derived from the row sums already in flight ----
    avg = (row_sum * inv_hw - mean1_col) * inv_std1_col       # (N*C_mid, 1)
    avg_ref[...] = avg

    # ---- conv2 (1x1 on 1x1 spatial) + bias + ReLU: column form, no (1,1) tiles ----
    scaled = avg * w2c_ref[...]                               # (N*C_mid, C_out)
    y2_rows = [jnp.sum(scaled[n * c_mid:(n + 1) * c_mid, :], axis=0, keepdims=True)
               for n in range(n_batch)]                       # N x (1, C_out)
    y2 = jnp.concatenate(y2_rows, axis=0) + b2r_ref[...]      # (N, C_out)
    x2 = jnp.maximum(y2, 0.0)

    # ---- bn2 (training mode): per-channel stats over the batch axis ----
    mean2 = jnp.sum(x2, axis=0, keepdims=True) * inv_n        # (1, C_out)
    var2 = jnp.sum(x2 * x2, axis=0, keepdims=True) * inv_n - mean2 * mean2
    inv_std2 = jax.lax.rsqrt(var2 + EPS)
    out_ref[...] = (x2 - mean2) * inv_std2                    # (N, C_out)


def linear_test_model(x_nchw, w1, b1, w2, b2):
    """x_nchw: (N, C_in, H, W) f32; w1: (C_mid, C_in); w2: (C_out, C_mid)."""
    N, C_in, H, W = x_nchw.shape
    C_mid = w1.shape[0]
    C_out = w2.shape[0]
    HW = H * W

    f32 = jnp.float32
    w1 = w1.astype(f32)
    b1 = b1.astype(f32)
    w2 = w2.astype(f32)
    b2 = b2.astype(f32)

    # NCHW -> (N*C_in, H*W): free reshape, no transpose.
    x_flat = x_nchw.reshape(N * C_in, HW).astype(f32)

    # Weight-layout plumbing (tiny, done once in the wrapper):
    w1_block = jnp.kron(jnp.eye(N, dtype=f32), w1)            # (N*C_mid, N*C_in)
    b1_col = jnp.tile(b1.reshape(C_mid, 1), (N, 1))           # (N*C_mid, 1)
    w2_cols = jnp.tile(w2.T, (N, 1))                          # (N*C_mid, C_out)
    b2_row = b2.reshape(1, C_out)                             # (1, C_out)

    vmem = pl.BlockSpec(memory_space=pltpu.MemorySpace.VMEM)

    out, relu, bn1, avg = pl.pallas_call(
        _linear_test_model_kernel,
        in_specs=[vmem, vmem, vmem, vmem, vmem],
        out_specs=[vmem, vmem, vmem, vmem],
        out_shape=(
            jax.ShapeDtypeStruct((N, C_out), f32),            # bn2 output
            jax.ShapeDtypeStruct((N * C_mid, HW), f32),       # relu(conv1)
            jax.ShapeDtypeStruct((N * C_mid, HW), f32),       # bn1
            jax.ShapeDtypeStruct((N * C_mid, 1), f32),        # avg_pool
        ),
    )(x_flat, w1_block, b1_col, w2_cols, b2_row)

    # back to PyTorch NCHW shapes (all free reshapes)
    relu_nchw = relu.reshape(N, C_mid, H, W)
    bn1_nchw = bn1.reshape(N, C_mid, H, W)
    avg_nchw = avg.reshape(N, C_mid, 1, 1)
    out_nchw = out.reshape(N, C_out, 1, 1)
    return out_nchw, relu_nchw, bn1_nchw, avg_nchw


def _reference(x, w1, b1, w2, b2):
    """Pure-JAX reference of the PyTorch forward (training-mode BN)."""
    y1 = jnp.einsum('nchw,oc->nohw', x, w1) + b1[None, :, None, None]
    relu = jnp.maximum(y1, 0.0)
    mean1 = jnp.mean(relu, axis=(0, 2, 3), keepdims=True)
    var1 = jnp.mean((relu - mean1) ** 2, axis=(0, 2, 3), keepdims=True)
    bn1 = (relu - mean1) * jax.lax.rsqrt(var1 + EPS)
    avg = jnp.mean(bn1, axis=(2, 3), keepdims=True)
    y2 = jnp.einsum('nchw,oc->nohw', avg, w2) + b2[None, :, None, None]
    x2 = jnp.maximum(y2, 0.0)
    mean2 = jnp.mean(x2, axis=(0, 2, 3), keepdims=True)
    var2 = jnp.mean((x2 - mean2) ** 2, axis=(0, 2, 3), keepdims=True)
    out = (x2 - mean2) * jax.lax.rsqrt(var2 + EPS)
    return out, relu, bn1, avg


if __name__ == "__main__":
    key = jax.random.PRNGKey(0)
    k_w1, k_b1, k_w2, k_b2, k_x = jax.random.split(key, 5)

    # shapes implied by the module: Conv2d(3,3,1) -> BN(3) -> pool -> Conv2d(3,1,1) -> BN(1)
    C_in, C_mid, C_out = 3, 3, 1
    N, H, W = 2, 16, 16

    # conv weights ~ U[-0.5, 0.5) like `torch.rand_like(w) - 0.5`, PyTorch OI layout.
    w1 = jax.random.uniform(k_w1, (C_mid, C_in), jnp.float32, -0.5, 0.5)
    b1 = jax.random.uniform(k_b1, (C_mid,), jnp.float32, -0.5, 0.5)
    w2 = jax.random.uniform(k_w2, (C_out, C_mid), jnp.float32, -0.5, 0.5)
    b2 = jax.random.uniform(k_b2, (C_out,), jnp.float32, -0.5, 0.5)

    x = jax.random.uniform(k_x, (N, C_in, H, W), jnp.float32)

    outs = linear_test_model(x, w1, b1, w2, b2)
    jax.block_until_ready(outs)

    out_t, relu_t, bn1_t, avg_t = outs
    assert out_t.shape == (N, C_out, 1, 1)
    assert relu_t.shape == (N, C_mid, H, W)
    assert bn1_t.shape == (N, C_mid, H, W)
    assert avg_t.shape == (N, C_mid, 1, 1)

    # numerical check against pure-JAX reference
    ref_out, ref_relu, ref_bn1, ref_avg = _reference(x, w1, b1, w2, b2)
    assert bool(jnp.allclose(relu_t, ref_relu, rtol=1e-4, atol=1e-4))
    assert bool(jnp.allclose(bn1_t, ref_bn1, rtol=1e-4, atol=1e-4))
    assert bool(jnp.allclose(avg_t, ref_avg, rtol=1e-4, atol=1e-4))
    assert bool(jnp.allclose(out_t, ref_out, rtol=1e-4, atol=1e-4))

    print("KERNEL_OK")
</pallas_src>

<mosaic_0001>
module attributes {stable_mosaic.version = 11 : i64} {
  func.func @_linear_test_model_kernel(%arg0: memref<6x256xf32, #tpu.memory_space<vmem>>, %arg1: memref<6x6xf32, #tpu.memory_space<vmem>>, %arg2: memref<6x1xf32, #tpu.memory_space<vmem>>, %arg3: memref<6x1xf32, #tpu.memory_space<vmem>>, %arg4: memref<1x1xf32, #tpu.memory_space<vmem>>, %arg5: memref<2x1xf32, #tpu.memory_space<vmem>>, %arg6: memref<6x256xf32, #tpu.memory_space<vmem>>, %arg7: memref<6x256xf32, #tpu.memory_space<vmem>>, %arg8: memref<6x1xf32, #tpu.memory_space<vmem>>) attributes {dimension_semantics = [], scalar_prefetch = 0 : i64, scratch_operands = 0 : i64, tpu.core_type = #tpu.core_type<tc>} {
    %c0 = arith.constant 0 : index
    %c0_0 = arith.constant 0 : index
    %0 = vector.load %arg0[%c0, %c0_0] : memref<6x256xf32, #tpu.memory_space<vmem>>, vector<6x256xf32>
    %c0_1 = arith.constant 0 : index
    %c0_2 = arith.constant 0 : index
    %1 = vector.load %arg1[%c0_1, %c0_2] : memref<6x6xf32, #tpu.memory_space<vmem>>, vector<6x6xf32>
    %cst = arith.constant dense<0.000000e+00> : vector<6x256xf32>
    %2 = tpu.matmul %1, %0, %cst {dimension_numbers = #tpu.dot_dimension_numbers<[1], [0], [0], [1], [0, 0, 1, 1], [], []>} : vector<6x6xf32>, vector<6x256xf32>, vector<6x256xf32> -> vector<6x256xf32>
    %c0_3 = arith.constant 0 : index
    %c0_4 = arith.constant 0 : index
    %3 = vector.load %arg2[%c0_3, %c0_4] : memref<6x1xf32, #tpu.memory_space<vmem>>, vector<6x1xf32>
    %4 = vector.broadcast %3 : vector<6x1xf32> to vector<6x256xf32>
    %5 = arith.addf %2, %4 : vector<6x256xf32>
    %cst_5 = arith.constant 0.000000e+00 : f32
    %6 = vector.broadcast %cst_5 : f32 to vector<6x256xf32>
    %7 = arith.maximumf %5, %6 : vector<6x256xf32>
    %c0_6 = arith.constant 0 : index
    %c0_7 = arith.constant 0 : index
    %8 = vector.load %arg6[%c0_6, %c0_7] : memref<6x256xf32, #tpu.memory_space<vmem>>, vector<6x256xf32>
    tpu.vector_store %arg6[%c0_6, %c0_7], %7 {strides = array<i32>} : memref<6x256xf32, #tpu.memory_space<vmem>>, vector<6x256xf32>,
    %cst_8 = arith.constant dense<0.000000e+00> : vector<6xf32>
    %9 = vector.multi_reduction <add>, %7, %cst_8 [1] : vector<6x256xf32> to vector<6xf32>
    %10 = vector.shape_cast %9 : vector<6xf32> to vector<6x1xf32>
    %11 = arith.mulf %7, %7 : vector<6x256xf32>
    %cst_9 = arith.constant dense<0.000000e+00> : vector<6xf32>
    %12 = vector.multi_reduction <add>, %11, %cst_9 [1] : vector<6x256xf32> to vector<6xf32>
    %13 = vector.shape_cast %12 : vector<6xf32> to vector<6x1xf32>
    %14 = vector.extract_strided_slice %10 {offsets = [0, 0], sizes = [3, 1], strides = [1, 1]} : vector<6x1xf32> to vector<3x1xf32>
    %15 = vector.extract_strided_slice %13 {offsets = [0, 0], sizes = [3, 1], strides = [1, 1]} : vector<6x1xf32> to vector<3x1xf32>
    %16 = vector.extract_strided_slice %10 {offsets = [3, 0], sizes = [3, 1], strides = [1, 1]} : vector<6x1xf32> to vector<3x1xf32>
    %17 = arith.addf %14, %16 : vector<3x1xf32>
    %18 = vector.extract_strided_slice %13 {offsets = [3, 0], sizes = [3, 1], strides = [1, 1]} : vector<6x1xf32> to vector<3x1xf32>
    %19 = arith.addf %15, %18 : vector<3x1xf32>
    %cst_10 = arith.constant 0.001953125 : f32
    %20 = vector.broadcast %cst_10 : f32 to vector<3x1xf32>
    %21 = arith.mulf %17, %20 : vector<3x1xf32>
    %cst_11 = arith.constant 0.001953125 : f32
    %22 = vector.broadcast %cst_11 : f32 to vector<3x1xf32>
    %23 = arith.mulf %19, %22 : vector<3x1xf32>
    %24 = arith.mulf %21, %21 : vector<3x1xf32>
    %25 = arith.subf %23, %24 : vector<3x1xf32>
    %cst_12 = arith.constant 9.99999974E-6 : f32
    %26 = vector.broadcast %cst_12 : f32 to vector<3x1xf32>
    %27 = arith.addf %25, %26 : vector<3x1xf32>
    %28 = math.rsqrt %27 : vector<3x1xf32>
    %29 = tpu.concatenate %21, %21 in 0 : vector<3x1xf32>, vector<3x1xf32> -> vector<6x1xf32>
    %30 = tpu.concatenate %28, %28 in 0 : vector<3x1xf32>, vector<3x1xf32> -> vector<6x1xf32>
    %31 = vector.broadcast %29 : vector<6x1xf32> to vector<6x256xf32>
    %32 = arith.subf %7, %31 : vector<6x256xf32>
    %33 = vector.broadcast %30 : vector<6x1xf32> to vector<6x256xf32>
    %34 = arith.mulf %32, %33 : vector<6x256xf32>
    %c0_13 = arith.constant 0 : index
    %c0_14 = arith.constant 0 : index
    %35 = vector.load %arg7[%c0_13, %c0_14] : memref<6x256xf32, #tpu.memory_space<vmem>>, vector<6x256xf32>
    tpu.vector_store %arg7[%c0_13, %c0_14], %34 {strides = array<i32>} : memref<6x256xf32, #tpu.memory_space<vmem>>, vector<6x256xf32>,
    %cst_15 = arith.constant 3.906250e-03 : f32
    %36 = vector.broadcast %cst_15 : f32 to vector<6x1xf32>
    %37 = arith.mulf %10, %36 : vector<6x1xf32>
    %38 = arith.subf %37, %29 : vector<6x1xf32>
    %39 = arith.mulf %38, %30 : vector<6x1xf32>
    %c0_16 = arith.constant 0 : index
    %c0_17 = arith.constant 0 : index
    %40 = vector.load %arg8[%c0_16, %c0_17] : memref<6x1xf32, #tpu.memory_space<vmem>>, vector<6x1xf32>
    tpu.vector_store %arg8[%c0_16, %c0_17], %39 {strides = array<i32>} : memref<6x1xf32, #tpu.memory_space<vmem>>, vector<6x1xf32>,
    %c0_18 = arith.constant 0 : index
    %c0_19 = arith.constant 0 : index
    %41 = vector.load %arg3[%c0_18, %c0_19] : memref<6x1xf32, #tpu.memory_space<vmem>>, vector<6x1xf32>
    %42 = arith.mulf %39, %41 : vector<6x1xf32>
    %43 = vector.extract_strided_slice %42 {offsets = [0, 0], sizes = [3, 1], strides = [1, 1]} : vector<6x1xf32> to vector<3x1xf32>
    %cst_20 = arith.constant dense<0.000000e+00> : vector<1xf32>
    %44 = vector.multi_reduction <add>, %43, %cst_20 [0] : vector<3x1xf32> to vector<1xf32>
    %45 = vector.shape_cast %44 : vector<1xf32> to vector<1x1xf32>
    %46 = vector.extract_strided_slice %42 {offsets = [3, 0], sizes = [3, 1], strides = [1, 1]} : vector<6x1xf32> to vector<3x1xf32>
    %cst_21 = arith.constant dense<0.000000e+00> : vector<1xf32>
    %47 = vector.multi_reduction <add>, %46, %cst_21 [0] : vector<3x1xf32> to vector<1xf32>
    %48 = vector.shape_cast %47 : vector<1xf32> to vector<1x1xf32>
    %49 = tpu.concatenate %45, %48 in 0 : vector<1x1xf32>, vector<1x1xf32> -> vector<2x1xf32>
    %c0_22 = arith.constant 0 : index
    %c0_23 = arith.constant 0 : index
    %50 = vector.load %arg4[%c0_22, %c0_23] : memref<1x1xf32, #tpu.memory_space<vmem>>, vector<1x1xf32>
    %51 = vector.broadcast %50 : vector<1x1xf32> to vector<2x1xf32>
    %52 = arith.addf %49, %51 : vector<2x1xf32>
    %cst_24 = arith.constant 0.000000e+00 : f32
    %53 = vector.broadcast %cst_24 : f32 to vector<2x1xf32>
    %54 = arith.maximumf %52, %53 : vector<2x1xf32>
    %cst_25 = arith.constant dense<0.000000e+00> : vector<1xf32>
    %55 = vector.multi_reduction <add>, %54, %cst_25 [0] : vector<2x1xf32> to vector<1xf32>
    %56 = vector.shape_cast %55 : vector<1xf32> to vector<1x1xf32>
    %cst_26 = arith.constant 5.000000e-01 : f32
    %57 = vector.broadcast %cst_26 : f32 to vector<1x1xf32>
    %58 = arith.mulf %56, %57 : vector<1x1xf32>
    %59 = arith.mulf %54, %54 : vector<2x1xf32>
    %cst_27 = arith.constant dense<0.000000e+00> : vector<1xf32>
    %60 = vector.multi_reduction <add>, %59, %cst_27 [0] : vector<2x1xf32> to vector<1xf32>
    %61 = vector.shape_cast %60 : vector<1xf32> to vector<1x1xf32>
    %cst_28 = arith.constant 5.000000e-01 : f32
    %62 = vector.broadcast %cst_28 : f32 to vector<1x1xf32>
    %63 = arith.mulf %61, %62 : vector<1x1xf32>
    %64 = arith.mulf %58, %58 : vector<1x1xf32>
    %65 = arith.subf %63, %64 : vector<1x1xf32>
    %cst_29 = arith.constant 9.99999974E-6 : f32
    %66 = vector.broadcast %cst_29 : f32 to vector<1x1xf32>
    %67 = arith.addf %65, %66 : vector<1x1xf32>
    %68 = math.rsqrt %67 : vector<1x1xf32>
    %69 = vector.broadcast %58 : vector<1x1xf32> to vector<2x1xf32>
    %70 = arith.subf %54, %69 : vector<2x1xf32>
    %71 = vector.broadcast %68 : vector<1x1xf32> to vector<2x1xf32>
    %72 = arith.mulf %70, %71 : vector<2x1xf32>
    %c0_30 = arith.constant 0 : index
    %c0_31 = arith.constant 0 : index
    %73 = vector.load %arg5[%c0_30, %c0_31] : memref<2x1xf32, #tpu.memory_space<vmem>>, vector<2x1xf32>
    tpu.vector_store %arg5[%c0_30, %c0_31], %72 {strides = array<i32>} : memref<2x1xf32, #tpu.memory_space<vmem>>, vector<2x1xf32>,
    return
  }
}

</mosaic_0001>

<llo_original>
// kernel: tpu_custom_call.1
$region0: #{tpu_custom_call.1}
  #allocation0 [shape = 'u32[]', space=smem, size = 0x4, offset = 0x4, fixed_abs, tag = 'smem constant byte address 0x4 - core index']
  #allocation1 [shape = 'u32[144,128]{1,0:T(1,128)}', space=vmem, size = 0x12000, scoped, tag = 'internal scratch']
  #allocation2 [shape = 'f32[1,1]{1,0:T(1,128)S(1)}', space=vmem, size = 0x200, scoped, tag = 'scoped memory for tpu_custom_call.1']
  %s0 = inlined_call_operand.vmem [shape: f32[6,256], index: 0, kind: input, shape index: {}]
  %s1 = inlined_call_operand.vmem [shape: f32[6,6], index: 1, kind: input, shape index: {}]
  %s2 = inlined_call_operand.vmem [shape: f32[6,1], index: 2, kind: input, shape index: {}]
  %s3 = inlined_call_operand.vmem [shape: f32[6,1], index: 3, kind: input, shape index: {}]
  %s4 = inlined_call_operand.<no memory space> [shape: f32[1,1], index: 4, kind: input, shape index: {}]
  %s5 = inlined_call_operand.vmem [shape: f32[2,1], index: 5, kind: output, shape index: {0}]
  %s6 = inlined_call_operand.hbm [shape: f32[6,256], index: 6, kind: output, shape index: {1}]
  %s7 = inlined_call_operand.hbm [shape: f32[6,256], index: 7, kind: output, shape index: {2}]
  %s8 = inlined_call_operand.vmem [shape: f32[6,1], index: 8, kind: output, shape index: {3}]
  %9 = xla_tuple %s5, %s6, %s7, %s8
  %s10 = sld [smem:[#allocation0]]
  $region54: #{tpu_custom_call.1} parent=0
    _
  %s12 = ssub.s32 1, %s10
  %s13 = scalar_select 0, %s12, %s10
  %v14 = vstv %s4
  %15 = vst [vmem:[#allocation2] sm:$0x1] %v14
  $region1: #{tpu_custom_call.1} parent=0
    #allocation3 [shape = 'u8[8192]{0}', space=vmem, size = 0x2000, scoped, tag = 'output window, operand 1, single buffered']
    #allocation4 [shape = 's32[1]{0}', space=sflag, size = 0x4, scoped, tag = 'scoped memory for tpu_custom_call.1']
    #allocation5 [shape = 'u8[8192]{0}', space=vmem, size = 0x2000, scoped, tag = 'output window, operand 2, single buffered']
    #allocation6 [shape = 's32[1]{0}', space=sflag, size = 0x4, scoped, tag = 'scoped memory for tpu_custom_call.1']
    %16 = vsyncpa [#allocation4], 0
    %17 = vsyncpa [#allocation6], 0
    // Predicated region
    $region2: #{tpu_custom_call.1} parent=1 // pred_check
      _
    $region3: #{tpu_custom_call.1} parent=1 // pred_check_branch
      %19 = sbr.rel (0) target = $region5
    $region4: #{tpu_custom_call.1} parent=1 // pred_region
      _
    $region5: #{tpu_custom_call.1} parent=1 // pred_fallthru
      _
    // Predicated region
    $region6: #{tpu_custom_call.1} parent=1 // pred_check
      _
    $region7: #{tpu_custom_call.1} parent=1 // pred_check_branch
      %21 = sbr.rel (0) target = $region9
    $region8: #{tpu_custom_call.1} parent=1 // pred_region
      _
    $region9: #{tpu_custom_call.1} parent=1 // pred_fallthru
      _
    // Predicated region
    $region10: #{tpu_custom_call.1} parent=1 // pred_check
      _
    $region11: #{tpu_custom_call.1} parent=1 // pred_check_branch
      %23 = sbr.rel (0) target = $region13
    $region12: #{tpu_custom_call.1} parent=1 // pred_region
      _
    $region13: #{tpu_custom_call.1} parent=1 // pred_fallthru
      _
    // Predicated region
    $region14: #{tpu_custom_call.1} parent=1 // pred_check
      _
    $region15: #{tpu_custom_call.1} parent=1 // pred_check_branch
      %25 = sbr.rel (0) target = $region17
    $region16: #{tpu_custom_call.1} parent=1 // pred_region
      _
    $region17: #{tpu_custom_call.1} parent=1 // pred_fallthru
      _
    // Predicated region
    $region18: #{tpu_custom_call.1} parent=1 // pred_check
      _
    $region19: #{tpu_custom_call.1} parent=1 // pred_check_branch
      %27 = sbr.rel (0) target = $region21
    $region20: #{tpu_custom_call.1} parent=1 // pred_region
      _
    $region21: #{tpu_custom_call.1} parent=1 // pred_fallthru
      _
    %v28 = vld [vmem:[%s0] sm:$0x3f]
    %v29 = vld [vmem:[%s0 + $0x8] sm:$0x3f]
    %v30 = vld [vmem:[%s1] sm:$0x3f]
    %v31 = vld [vmem:[%s2] sm:$0x3f]
    %33 = vset.pattern.permute.xlu0 0
    %34 = vperm.xlu0 %33, %v31
    %v35 = vpop.permute.xlu0 %34
    %vm37 = vcmask 48128
    %v39 = vsel %vm37, %v30, 0
    %vm41 = vcmask 1045504
    %v43 = vsel %vm41, %v28, 0
    %v46 = vsel %vm41, %v29, 0
    %48 = vmatprep.subr.mxu0 %v46
    %49 = vmatpush1.msra.mxu0 %v43
    %50 = vmatprep.subr.mxu0 0.0
    %51 = vmatpush1.msra.mxu0 0.0
    %52 = vmatprep.subr.mxu0 0.0
    %53 = vmatpush1.msra.mxu0 0.0
    %54 = vmatprep.subr.mxu0 0.0
    %55 = vmatpush1.msra.mxu0 0.0
    %56 = vmatprep.subr.mxu0 0.0
    %57 = vmatpush1.msra.mxu0 0.0
    %58 = vmatprep.subr.mxu0 0.0
    %59 = vmatpush1.msra.mxu0 0.0
    %60 = vmatprep.subr.mxu0 0.0
    %61 = vmatpush1.msra.mxu0 0.0
    %62 = vmatprep.subr.mxu0 0.0
    %63 = vmatpush1.msra.mxu0 0.0
    %64 = vmatprep.subr.mxu0 0.0
    %65 = vmatpush1.msra.mxu0 0.0
    %66 = vmatprep.subr.mxu0 0.0
    %67 = vmatpush1.msra.mxu0 0.0
    %68 = vmatprep.subr.mxu0 0.0
    %69 = vmatpush1.msra.mxu0 0.0
    %70 = vmatprep.subr.mxu0 0.0
    %71 = vmatpush1.msra.mxu0 0.0
    %72 = vmatprep.subr.mxu0 0.0
    %73 = vmatpush1.msra.mxu0 0.0
    %74 = vmatprep.subr.mxu0 0.0
    %75 = vmatpush1.msra.mxu0 0.0
    %76 = vmatprep.subr.mxu0 0.0
    %77 = vmatpush1.msra.mxu0 0.0
    %78 = vmatprep.subr.mxu0 0.0
    %79 = vmatpush1.msra.mxu0 0.0
    %80 = vmatprep.subr.mxu0 0.0
    %81 = vmatpush1.msra.mxu0 0.0
    %82 = vmatprep.subr.mxu0 0.0
    %83 = vmatpush1.msra.mxu0 0.0
    %84 = vmatprep.subr.mxu0 0.0
    %85 = vmatpush1.msra.mxu0 0.0
    %86 = vmatprep.subr.mxu0 0.0
    %87 = vmatpush1.msra.mxu0 0.0
    %88 = vmatprep.subr.mxu0 0.0
    %89 = vmatpush1.msra.mxu0 0.0
    %90 = vmatprep.subr.mxu0 0.0
    %91 = vmatpush1.msra.mxu0 0.0
    %92 = vmatprep.subr.mxu0 0.0
    %93 = vmatpush1.msra.mxu0 0.0
    %94 = vmatprep.subr.mxu0 0.0
    %95 = vmatpush1.msra.mxu0 0.0
    %96 = vmatprep.subr.mxu0 0.0
    %97 = vmatpush1.msra.mxu0 0.0
    %98 = vmatprep.subr.mxu0 0.0
    %99 = vmatpush1.msra.mxu0 0.0
    %100 = vmatprep.subr.mxu0 0.0
    %101 = vmatpush1.msra.mxu0 0.0
    %102 = vmatprep.subr.mxu0 0.0
    %103 = vmatpush1.msra.mxu0 0.0
    %104 = vmatprep.subr.mxu0 0.0
    %105 = vmatpush1.msra.mxu0 0.0
    %106 = vmatprep.subr.mxu0 0.0
    %107 = vmatpush1.msra.mxu0 0.0
    %108 = vmatprep.subr.mxu0 0.0
    %109 = vmatpush1.msra.mxu0 0.0
    %110 = vmatprep.subr.mxu0 0.0
    %111 = vmatpush1.msra.mxu0 0.0
    %112 = vmatprep.mubr.f32.mxu0 0.0
    %113 = vmatmul.mubr.f32.gmra.mrb[0].mxu0 %v39
    %v114 = vpop.f32.mrb[0].mxu0
    %v115 = vadd.f32 %v35, %v114
    %v116 = vpop.f32.mrb[0].mxu0
    %v117 = vadd.f32 %v35, %v116
    %118 = vdwg.mxu0
    %v119 = vmax.f32 %v115, 0.0
    %v120 = vmax.f32 %v117, 0.0
    %121 = vst [vmem:[#allocation3] sm:$0x3f] %v119
    %122 = vst [vmem:[#allocation3 + $0x8] sm:$0x3f] %v120
    %v123 = vsel %vm41, %v119, 0.0
    %v124 = vsel %vm41, %v120, 0.0
    %v125 = vadd.f32 %v123, %v124
    %126 = vadd.xlane.f32.xlu0 %v125
    %v127 = vpop.xlane.xlu0 %126
    %v128 = vmul.f32 %v119, %v119
    %v129 = vmul.f32 %v120, %v120
    %v130 = vsel %vm41, %v128, 0.0
    %v131 = vsel %vm41, %v129, 0.0
    %v132 = vadd.f32 %v130, %v131
    %133 = vadd.xlane.f32.xlu0 %v132
    %v134 = vpop.xlane.xlu0 %133
    %v136 = vrot.slane %v127, 3
    %v138 = vadd.f32 %v127, %v136
    %v140 = vrot.slane %v134, 3
    %v142 = vadd.f32 %v134, %v140
    %v143 = vmul.f32 %v138, 0.001953125
    %v144 = vmul.f32 %v142, 0.001953125
    %v145 = vmul.f32 %v143, %v143
    %v146 = vsub.f32 %v144, %v145
    %v147 = vadd.f32 %v146, 1e-05
    %v148 = vrsqrt.pop %v147
    %v150 = vrot.slane %v143, 5
    %vm152 = vcmask 1042432
    %v153 = vsel %vm152, %v143, %v150
    %v155 = vrot.slane %v148, 5
    %v157 = vsel %vm152, %v148, %v155
    %159 = vset.pattern.permute.xlu0 0
    %160 = vperm.xlu0 %159, %v153
    %v161 = vpop.permute.xlu0 %160
    %v163 = vsub.f32 %v119, %v161
    %v164 = vsub.f32 %v120, %v161
    %166 = vset.pattern.permute.xlu0 0
    %167 = vperm.xlu0 %166, %v157
    %v168 = vpop.permute.xlu0 %167
    %v170 = vmul.f32 %v163, %v168
    %v171 = vmul.f32 %v164, %v168
    %172 = vst [vmem:[#allocation5] sm:$0x3f] %v170
    %173 = vst [vmem:[#allocation5 + $0x8] sm:$0x3f] %v171
    %v174 = vmul.f32 %v127, 0.00390625
    %v175 = vsub.f32 %v174, %v153
    %v176 = vmul.f32 %v175, %v157
    %vm177 = vcmask 5120
    %178 = vst.msk [vmem:[%s8] sm:$0x3f] %vm177, %v176
    %v179 = vld [vmem:[%s3] sm:$0x3f]
    %v180 = vmul.f32 %v176, %v179
    %vm181 = vcmask 2048
    %v182 = vsel %vm181, %v180, 0.0
    %v183 = vrot.slane %v182, 4
    %v184 = vadd.f32 %v182, %v183
    %v185 = vrot.slane %v184, 2
    %v186 = vadd.f32 %v184, %v185
    %v187 = vrot.slane %v186, 1
    %v188 = vadd.f32 %v186, %v187
    %v190 = vrot.slane %v180, 3
    %v192 = vsel %vm181, %v190, 0.0
    %v193 = vrot.slane %v192, 4
    %v194 = vadd.f32 %v192, %v193
    %v195 = vrot.slane %v194, 2
    %v196 = vadd.f32 %v194, %v195
    %v197 = vrot.slane %v196, 1
    %v198 = vadd.f32 %v196, %v197
    %vm199 = vcmask 1040384
    %v200 = vsel %vm199, %v188, %v198
    %v201 = vld [vmem:[#allocation2] sm:$0x1]
    %v203 = vlaneseq
    %v204 = vshrl.u32 %v203, 7
    %v205 = vsub.s32 0, %v204
    %v206 = vrot.slane %v201, %v205
    %v208 = vadd.f32 %v200, %v206
    %v209 = vmax.f32 %v208, 0.0
    %vm210 = vcmask 1024
    %v211 = vsel %vm210, %v209, 0.0
    %v212 = vrot.slane %v211, 4
    %v213 = vadd.f32 %v211, %v212
    %v214 = vrot.slane %v213, 2
    %v215 = vadd.f32 %v213, %v214
    %v216 = vrot.slane %v215, 1
    %v217 = vadd.f32 %v215, %v216
    %v218 = vmul.f32 %v217, 0.5
    %v219 = vmul.f32 %v209, %v209
    %v220 = vsel %vm210, %v219, 0.0
    %v221 = vrot.slane %v220, 4
    %v222 = vadd.f32 %v220, %v221
    %v223 = vrot.slane %v222, 2
    %v224 = vadd.f32 %v222, %v223
    %v225 = vrot.slane %v224, 1
    %v226 = vadd.f32 %v224, %v225
    %v227 = vmul.f32 %v226, 0.5
    %v228 = vmul.f32 %v218, %v218
    %v229 = vsub.f32 %v227, %v228
    %v230 = vadd.f32 %v229, 1e-05
    %v231 = vrsqrt.pop %v230
    %v232 = vsub.f32 %v209, %v218
    %v233 = vmul.f32 %v232, %v231
    %234 = vst.msk [vmem:[%s5] sm:$0x3] %vm210, %v233
    // Predicated region
    $region22: #{tpu_custom_call.1} parent=1 // pred_check
      _
    $region23: #{tpu_custom_call.1} parent=1 // pred_check_branch
      %236 = sbr.rel (0) target = $region25
    $region24: #{tpu_custom_call.1} parent=1 // pred_region
      _
    $region25: #{tpu_custom_call.1} parent=1 // pred_fallthru
      _
    // Predicated region
    $region26: #{tpu_custom_call.1} parent=1 // pred_check
      _
    $region27: #{tpu_custom_call.1} parent=1 // pred_check_branch
      %238 = sbr.rel (0) target = $region29
    $region28: #{tpu_custom_call.1} parent=1 // pred_region
      %s240 = ssub.s32 256, 256
      %241 = vsyncadd [#allocation4], %s240
      %s243 = sshll.u32 [#allocation3], 4
      %s244 = int_to_ptr.vmem [resolvable:$true] %s243
      %246 = dma.vmem_to_hbm [thread:$0]  %s244, 256, %s6, [#allocation4]
    $region29: #{tpu_custom_call.1} parent=1 // pred_fallthru
      _
    // Predicated region
    $region30: #{tpu_custom_call.1} parent=1 // pred_check
      _
    $region31: #{tpu_custom_call.1} parent=1 // pred_check_branch
      %248 = sbr.rel (0) target = $region33
    $region32: #{tpu_custom_call.1} parent=1 // pred_region
      %s250 = ssub.s32 256, 256
      %251 = vsyncadd [#allocation6], %s250
      %s253 = sshll.u32 [#allocation5], 4
      %s254 = int_to_ptr.vmem [resolvable:$true] %s253
      %256 = dma.vmem_to_hbm [thread:$0]  %s254, 256, %s7, [#allocation6]
    $region33: #{tpu_custom_call.1} parent=1 // pred_fallthru
      _
    // Predicated region
    $region34: #{tpu_custom_call.1} parent=1 // pred_check
      _
    $region35: #{tpu_custom_call.1} parent=1 // pred_check_branch
      %258 = sbr.rel (0) target = $region37
    $region36: #{tpu_custom_call.1} parent=1 // pred_region
      _
    $region37: #{tpu_custom_call.1} parent=1 // pred_fallthru
      _
    // Predicated region
    $region38: #{tpu_custom_call.1} parent=1 // pred_check
      _
    $region39: #{tpu_custom_call.1} parent=1 // pred_check_branch
      %260 = sbr.rel (0) target = $region41
    $region40: #{tpu_custom_call.1} parent=1 // pred_region
      _
    $region41: #{tpu_custom_call.1} parent=1 // pred_fallthru
      _
    // Predicated region
    $region42: #{tpu_custom_call.1} parent=1 // pred_check
      _
    $region43: #{tpu_custom_call.1} parent=1 // pred_check_branch
      %262 = sbr.rel (0) target = $region45
    $region44: #{tpu_custom_call.1} parent=1 // pred_region
      %263 = dma.done [#allocation4], 256
    $region45: #{tpu_custom_call.1} parent=1 // pred_fallthru
      _
    // Predicated region
    $region46: #{tpu_custom_call.1} parent=1 // pred_check
      _
    $region47: #{tpu_custom_call.1} parent=1 // pred_check_branch
      %265 = sbr.rel (0) target = $region49
    $region48: #{tpu_custom_call.1} parent=1 // pred_region
      %266 = dma.done [#allocation6], 256
    $region49: #{tpu_custom_call.1} parent=1 // pred_fallthru
      _
    // Predicated region
    $region50: #{tpu_custom_call.1} parent=1 // pred_check
      _
    $region51: #{tpu_custom_call.1} parent=1 // pred_check_branch
      %268 = sbr.rel (0) target = $region53
    $region52: #{tpu_custom_call.1} parent=1 // pred_region
      _
    $region53: #{tpu_custom_call.1} parent=1 // pred_fallthru
      _
    %269 = vsyncpa [#allocation4], 1
    %270 = vsyncpa [#allocation6], 1

</llo_original>
